<compile_context>
chip_gen: v7x
topology: tpu7x:2x2x1
jax: 0.10.0
libtpu: 0.0.40
codegen_flags: <defaults>
</compile_context>

<pallas_src>
import math

import jax
import jax.numpy as jnp
from jax.experimental import pallas as pl
from jax.experimental.pallas import tpu as pltpu


def _cross_conv_kernel(x_ref, halo_ref, w_ref, o_ref, stk_ref):
    # x_ref:    (1, Cin, L)          flattened row-tile of the image (L = TH*W)
    # halo_ref: (1, 1, 2, Cin, W)    [0] = row just above the tile, [1] = row below
    # w_ref:    (Cout, 5*Cin_pad)    taps [up | left | center - theta*sum | right | down]
    # o_ref:    (1, Cout, L)
    # stk_ref:  (5*Cin_pad, L)       VMEM scratch: the MXU operand, assembled in place
    cin = x_ref.shape[1]
    length = x_ref.shape[2]            # TH * W
    width = halo_ref.shape[4]          # W
    cin_pad = stk_ref.shape[0] // 5
    pad = cin_pad - cin

    top = halo_ref[0, 0, 0, :, :]      # (Cin, W)
    bot = halo_ref[0, 0, 1, :, :]      # (Cin, W)

    # Column-within-row index, used to kill the row-wrap of the +-1 lane shifts.
    col = jax.lax.broadcasted_iota(jnp.int32, (1, length), 1) % width

    # Scratch is uninitialized VMEM: zero the sublane-padding rows of each band
    # (statically skipped when Cin is already a multiple of the sublane count).
    if pad:
        zpad = jnp.zeros((pad, length), stk_ref.dtype)
        for t in range(5):
            stk_ref[t * cin_pad + cin:(t + 1) * cin_pad, :] = zpad

    # Each band is written exactly once into its sublane-aligned row slice.
    # Shifts run on the XLU (pltpu.roll); fix-ups are narrow W-wide stores.
    # band 0: up = x[h-1, w]; the first W lanes come from the top halo row.
    stk_ref[0:cin, :] = pltpu.roll(x_ref[0], width, axis=1)
    stk_ref[0:cin, 0:width] = top
    # band 1: left = x[h, w-1]; zero the wrapped first column of every row.
    stk_ref[cin_pad:cin_pad + cin, :] = jnp.where(
        col == 0, 0.0, pltpu.roll(x_ref[0], 1, axis=1))
    # band 2: center (theta already folded into the centre tap on the host).
    stk_ref[2 * cin_pad:2 * cin_pad + cin, :] = x_ref[0]
    # band 3: right = x[h, w+1]; zero the wrapped last column of every row.
    stk_ref[3 * cin_pad:3 * cin_pad + cin, :] = jnp.where(
        col == width - 1, 0.0, pltpu.roll(x_ref[0], length - 1, axis=1))
    # band 4: down = x[h+1, w]; the last W lanes come from the bottom halo row.
    stk_ref[4 * cin_pad:4 * cin_pad + cin, :] = pltpu.roll(
        x_ref[0], length - width, axis=1)
    stk_ref[4 * cin_pad:4 * cin_pad + cin, length - width:length] = bot

    # One fused MXU matmul over all 5 taps.
    out = jnp.dot(w_ref[...], stk_ref[...], preferred_element_type=jnp.float32)
    o_ref[0] = out.astype(o_ref.dtype)


def conv2d_hori_veri_cross(x_nchw, weight, theta=0.7, *, use_bf16=False):
    """x_nchw: (N, Cin, H, W); weight: (Cout, Cin, 1, 5). Returns (N, Cout, H, W) f32."""
    N, Cin, H, W = x_nchw.shape
    Cout = weight.shape[0]

    storage = jnp.bfloat16 if use_bf16 else jnp.float32
    sub = 16 if storage == jnp.bfloat16 else 8          # sublane packing granularity
    esize = 2 if storage == jnp.bfloat16 else 4
    cin_pad = -(-Cin // sub) * sub
    k_pad = 5 * cin_pad

    x = x_nchw.astype(storage)

    # ---- fold theta into the centre tap (exact algebraic identity) ---------
    taps = jnp.transpose(weight[:, :, 0, :], (0, 2, 1)).astype(jnp.float32)   # (Cout, 5, Cin)
    taps = taps.at[:, 2, :].add(-float(theta) * taps.sum(axis=1))
    w_eff = jnp.pad(taps, ((0, 0), (0, 0), (0, cin_pad - Cin)))               # (Cout, 5, Cin_pad)
    w_eff = w_eff.reshape(Cout, k_pad).astype(storage)   # [up | left | center_eff | right | down]

    # ---- pick the largest H-tile whose working set fits the VMEM budget ----
    r = 128 // math.gcd(W, 128)            # smallest row count with (r*W) % 128 == 0
    per_row = (2 * Cin + 2 * Cout + k_pad) * W * esize    # 2x in + 2x out + scratch, per row
    fixed = (4 * Cin * W + 2 * Cout * k_pad) * esize      # halos + weights (double buffered)
    budget = 20 * 1024 * 1024              # safe under v7x 32 MiB scoped / 64 MiB physical
    rows_budget = max(r, ((budget - fixed) // max(per_row, 1)) // r * r)
    max_th = -(-H // r) * r                # one tile covering the whole (padded) image
    th = max(r, min(max_th, rows_budget))
    Hp = -(-H // th) * th                  # zero-pad rows so Hp % th == 0
    gh = Hp // th
    L = th * W                             # multiple of 128 -> lane-dense blocks

    if Hp != H:
        x = jnp.pad(x, ((0, 0), (0, 0), (0, Hp - H), (0, 0)))

    # ---- one merged per-tile halo side-input: [row above | row below] ------
    zero_row = jnp.zeros((N, Cin, 1, W), storage)
    above = x[:, :, th - 1:Hp - 1:th, :]           # row i*th - 1   for i = 1..gh-1
    below = x[:, :, th:Hp:th, :]                   # row (i+1)*th   for i = 0..gh-2
    top_h = jnp.concatenate([zero_row, above], axis=2)        # (N, Cin, gh, W)
    bot_h = jnp.concatenate([below, zero_row], axis=2)        # (N, Cin, gh, W)
    halo = jnp.transpose(jnp.stack([top_h, bot_h], axis=2), (0, 3, 2, 1, 4))  # (N,gh,2,Cin,W)

    # ---- free (contiguous) flattened NCHW view ------------------------------
    x_flat = x.reshape(N, Cin, Hp * W)

    flops = 2 * N * Hp * W * k_pad * Cout
    bytes_accessed = (esize * (x_flat.size + halo.size + w_eff.size)
                      + 4 * N * Cout * Hp * W)

    out_flat = pl.pallas_call(
        _cross_conv_kernel,
        out_shape=jax.ShapeDtypeStruct((N, Cout, Hp * W), jnp.float32),
        grid=(gh, N),                              # gh first: shardable on v7x megacore
        in_specs=[
            pl.BlockSpec((1, Cin, L), lambda i, n: (n, 0, i)),
            pl.BlockSpec((1, 1, 2, Cin, W), lambda i, n: (n, i, 0, 0, 0)),
            pl.BlockSpec((Cout, k_pad), lambda i, n: (0, 0)),
        ],
        out_specs=pl.BlockSpec((1, Cout, L), lambda i, n: (n, 0, i)),
        scratch_shapes=[pltpu.VMEM((k_pad, L), storage)],
        compiler_params=pltpu.CompilerParams(
            dimension_semantics=("parallel", "parallel"),
            vmem_limit_bytes=32 * 1024 * 1024),
        cost_estimate=pl.CostEstimate(
            flops=int(flops), transcendentals=0,
            bytes_accessed=int(bytes_accessed)),
    )(x_flat, halo, w_eff)

    out = out_flat.reshape(N, Cout, Hp, W)
    if Hp != H:
        out = out[:, :, :H, :]
    return out


def _reference_forward(x_nchw, weight, theta=0.7):
    """Plain-JAX replica of the PyTorch forward (for verification)."""
    Cout, Cin, _, _ = weight.shape
    zeros = jnp.zeros((Cout, Cin, 1), weight.dtype)
    cw = jnp.concatenate(
        [zeros, weight[:, :, :, 0], zeros,
         weight[:, :, :, 1], weight[:, :, :, 2], weight[:, :, :, 3],
         zeros, weight[:, :, :, 4], zeros], axis=2)
    cw = cw.reshape(Cout, Cin, 3, 3)
    out_normal = jax.lax.conv_general_dilated(
        x_nchw, cw, window_strides=(1, 1), padding=((1, 1), (1, 1)),
        dimension_numbers=("NCHW", "OIHW", "NCHW"))
    kdiff = weight.sum(axis=(2, 3))[:, :, None, None]
    out_diff = jax.lax.conv_general_dilated(
        x_nchw, kdiff, window_strides=(1, 1), padding=((0, 0), (0, 0)),
        dimension_numbers=("NCHW", "OIHW", "NCHW"))
    return out_normal - theta * out_diff


if __name__ == "__main__":
    key = jax.random.PRNGKey(0)
    kx, kw = jax.random.split(key)

    N, C_in, C_out, H, W = 2, 4, 8, 16, 16
    theta = 0.7

    x = jax.random.normal(kx, (N, C_in, H, W), dtype=jnp.float32)
    weight = jax.random.normal(kw, (C_out, C_in, 1, 5), dtype=jnp.float32) * 0.1

    out = conv2d_hori_veri_cross(x, weight, theta=theta)
    out = jax.block_until_ready(out)

    ref = jax.block_until_ready(_reference_forward(x, weight, theta=theta))
    assert out.shape == (N, C_out, H, W)
    assert jnp.allclose(out, ref, atol=1e-4, rtol=1e-4), (
        float(jnp.max(jnp.abs(out - ref))))

    print("KERNEL_OK")
</pallas_src>

<mosaic_0001>
module attributes {stable_mosaic.version = 11 : i64} {
  func.func @_cross_conv_kernel(%arg0: i32, %arg1: i32, %arg2: memref<1x4x256xf32, #tpu.memory_space<vmem>>, %arg3: memref<1x1x2x4x16xf32, #tpu.memory_space<vmem>>, %arg4: memref<8x40xf32, #tpu.memory_space<vmem>>, %arg5: memref<1x8x256xf32, #tpu.memory_space<vmem>>, %arg6: memref<40x256xf32, #tpu.memory_space<vmem>>) attributes {dimension_semantics = [#tpu.dimension_semantics<parallel>, #tpu.dimension_semantics<parallel>], iteration_bounds = array<i64: 1, 2>, scalar_prefetch = 0 : i64, scratch_operands = 1 : i64, tpu.core_type = #tpu.core_type<tc>, window_params = [{transform_indices = @transform_0, window_bounds = array<i64: 1, 4, 256>}, {transform_indices = @transform_1, window_bounds = array<i64: 1, 1, 2, 4, 16>}, {pipeline_mode = #tpu.pipeline_mode<synchronous>, transform_indices = @transform_2, window_bounds = array<i64: 8, 40>}, {transform_indices = @transform_3, window_bounds = array<i64: 1, 8, 256>}]} {
    %c0 = arith.constant 0 : index
    %c0_0 = arith.constant 0 : index
    %c0_1 = arith.constant 0 : index
    %c0_2 = arith.constant 0 : index
    %c0_3 = arith.constant 0 : index
    %0 = vector.load %arg3[%c0, %c0_0, %c0_1, %c0_2, %c0_3] : memref<1x1x2x4x16xf32, #tpu.memory_space<vmem>>, vector<1x1x1x4x16xf32>
    %1 = vector.shape_cast %0 : vector<1x1x1x4x16xf32> to vector<4x16xf32>
    %c0_4 = arith.constant 0 : index
    %c0_5 = arith.constant 0 : index
    %c1 = arith.constant 1 : index
    %c0_6 = arith.constant 0 : index
    %c0_7 = arith.constant 0 : index
    %2 = vector.load %arg3[%c0_4, %c0_5, %c1, %c0_6, %c0_7] : memref<1x1x2x4x16xf32, #tpu.memory_space<vmem>>, vector<1x1x1x4x16xf32>
    %3 = vector.shape_cast %2 : vector<1x1x1x4x16xf32> to vector<4x16xf32>
    %4 = tpu.iota {dimensions = array<i32: 1>} : vector<1x256xi32>
    %c16_i32 = arith.constant 16 : i32
    %c0_i32 = arith.constant 0 : i32
    %5 = arith.cmpi eq, %c16_i32, %c0_i32 : i32
    %c1_i32 = arith.constant 1 : i32
    %6 = arith.select %5, %c1_i32, %c16_i32 : i32
    %7 = vector.broadcast %6 : i32 to vector<1x256xi32>
    %8 = arith.remsi %4, %7 : vector<1x256xi32>
    %c0_i32_8 = arith.constant 0 : i32
    %9 = vector.broadcast %c0_i32_8 : i32 to vector<1x256xi32>
    %10 = arith.cmpi ne, %8, %9 : vector<1x256xi32>
    %c0_i32_9 = arith.constant 0 : i32
    %11 = vector.broadcast %c0_i32_9 : i32 to vector<1x256xi32>
    %12 = arith.cmpi slt, %8, %11 : vector<1x256xi32>
    %c0_i32_10 = arith.constant 0 : i32
    %13 = arith.cmpi slt, %6, %c0_i32_10 : i32
    %14 = vector.broadcast %13 : i1 to vector<1x256xi1>
    %15 = vector.broadcast %14 : vector<1x256xi1> to vector<1x256xi1>
    %16 = arith.xori %12, %15 : vector<1x256xi1>
    %17 = arith.andi %16, %10 : vector<1x256xi1>
    %18 = vector.broadcast %6 : i32 to vector<1x256xi32>
    %19 = arith.addi %8, %18 : vector<1x256xi32>
    %20 = arith.select %17, %19, %8 : vector<1x256xi1>, vector<1x256xi32>
    %cst = arith.constant 0.000000e+00 : f32
    %21 = vector.broadcast %cst : f32 to vector<4x256xf32>
    %c4 = arith.constant 4 : index
    %c0_11 = arith.constant 0 : index
    %22 = vector.load %arg6[%c4, %c0_11] : memref<40x256xf32, #tpu.memory_space<vmem>>, vector<4x256xf32>
    tpu.vector_store %arg6[%c4, %c0_11], %21 {strides = array<i32>} : memref<40x256xf32, #tpu.memory_space<vmem>>, vector<4x256xf32>,
    %c12 = arith.constant 12 : index
    %c0_12 = arith.constant 0 : index
    %23 = vector.load %arg6[%c12, %c0_12] : memref<40x256xf32, #tpu.memory_space<vmem>>, vector<4x256xf32>
    tpu.vector_store %arg6[%c12, %c0_12], %21 {strides = array<i32>} : memref<40x256xf32, #tpu.memory_space<vmem>>, vector<4x256xf32>,
    %c20 = arith.constant 20 : index
    %c0_13 = arith.constant 0 : index
    %24 = vector.load %arg6[%c20, %c0_13] : memref<40x256xf32, #tpu.memory_space<vmem>>, vector<4x256xf32>
    tpu.vector_store %arg6[%c20, %c0_13], %21 {strides = array<i32>} : memref<40x256xf32, #tpu.memory_space<vmem>>, vector<4x256xf32>,
    %c28 = arith.constant 28 : index
    %c0_14 = arith.constant 0 : index
    %25 = vector.load %arg6[%c28, %c0_14] : memref<40x256xf32, #tpu.memory_space<vmem>>, vector<4x256xf32>
    tpu.vector_store %arg6[%c28, %c0_14], %21 {strides = array<i32>} : memref<40x256xf32, #tpu.memory_space<vmem>>, vector<4x256xf32>,
    %c36 = arith.constant 36 : index
    %c0_15 = arith.constant 0 : index
    %26 = vector.load %arg6[%c36, %c0_15] : memref<40x256xf32, #tpu.memory_space<vmem>>, vector<4x256xf32>
    tpu.vector_store %arg6[%c36, %c0_15], %21 {strides = array<i32>} : memref<40x256xf32, #tpu.memory_space<vmem>>, vector<4x256xf32>,
    %c0_16 = arith.constant 0 : index
    %c0_17 = arith.constant 0 : index
    %c0_18 = arith.constant 0 : index
    %27 = vector.load %arg2[%c0_16, %c0_17, %c0_18] : memref<1x4x256xf32, #tpu.memory_space<vmem>>, vector<1x4x256xf32>
    %28 = vector.shape_cast %27 : vector<1x4x256xf32> to vector<4x256xf32>
    %c16_i32_19 = arith.constant 16 : i32
    %29 = tpu.dynamic_rotate %28 by %c16_i32_19 dim 1 : vector<4x256xf32>, i32 -> vector<4x256xf32>
    %c0_20 = arith.constant 0 : index
    %c0_21 = arith.constant 0 : index
    %30 = vector.load %arg6[%c0_20, %c0_21] : memref<40x256xf32, #tpu.memory_space<vmem>>, vector<4x256xf32>
    tpu.vector_store %arg6[%c0_20, %c0_21], %29 {strides = array<i32>} : memref<40x256xf32, #tpu.memory_space<vmem>>, vector<4x256xf32>,
    %c0_22 = arith.constant 0 : index
    %c0_23 = arith.constant 0 : index
    %31 = vector.load %arg6[%c0_22, %c0_23] : memref<40x256xf32, #tpu.memory_space<vmem>>, vector<4x16xf32>
    tpu.vector_store %arg6[%c0_22, %c0_23], %1 {strides = array<i32>} : memref<40x256xf32, #tpu.memory_space<vmem>>, vector<4x16xf32>,
    %c0_i32_24 = arith.constant 0 : i32
    %32 = vector.broadcast %c0_i32_24 : i32 to vector<1x256xi32>
    %33 = arith.cmpi eq, %20, %32 : vector<1x256xi32>
    %c0_25 = arith.constant 0 : index
    %c0_26 = arith.constant 0 : index
    %c0_27 = arith.constant 0 : index
    %34 = vector.load %arg2[%c0_25, %c0_26, %c0_27] : memref<1x4x256xf32, #tpu.memory_space<vmem>>, vector<1x4x256xf32>
    %35 = vector.shape_cast %34 : vector<1x4x256xf32> to vector<4x256xf32>
    %c1_i32_28 = arith.constant 1 : i32
    %36 = tpu.dynamic_rotate %35 by %c1_i32_28 dim 1 : vector<4x256xf32>, i32 -> vector<4x256xf32>
    %cst_29 = arith.constant 0.000000e+00 : f32
    %37 = vector.shape_cast %33 : vector<1x256xi1> to vector<1x256xi1>
    %38 = vector.broadcast %37 : vector<1x256xi1> to vector<4x256xi1>
    %39 = vector.broadcast %cst_29 : f32 to vector<4x256xf32>
    %40 = arith.select %38, %39, %36 : vector<4x256xi1>, vector<4x256xf32>
    %c8 = arith.constant 8 : index
    %c0_30 = arith.constant 0 : index
    %41 = vector.load %arg6[%c8, %c0_30] : memref<40x256xf32, #tpu.memory_space<vmem>>, vector<4x256xf32>
    tpu.vector_store %arg6[%c8, %c0_30], %40 {strides = array<i32>} : memref<40x256xf32, #tpu.memory_space<vmem>>, vector<4x256xf32>,
    %c0_31 = arith.constant 0 : index
    %c0_32 = arith.constant 0 : index
    %c0_33 = arith.constant 0 : index
    %42 = vector.load %arg2[%c0_31, %c0_32, %c0_33] : memref<1x4x256xf32, #tpu.memory_space<vmem>>, vector<1x4x256xf32>
    %43 = vector.shape_cast %42 : vector<1x4x256xf32> to vector<4x256xf32>
    %c16 = arith.constant 16 : index
    %c0_34 = arith.constant 0 : index
    %44 = vector.load %arg6[%c16, %c0_34] : memref<40x256xf32, #tpu.memory_space<vmem>>, vector<4x256xf32>
    tpu.vector_store %arg6[%c16, %c0_34], %43 {strides = array<i32>} : memref<40x256xf32, #tpu.memory_space<vmem>>, vector<4x256xf32>,
    %c15_i32 = arith.constant 15 : i32
    %45 = vector.broadcast %c15_i32 : i32 to vector<1x256xi32>
    %46 = arith.cmpi eq, %20, %45 : vector<1x256xi32>
    %c0_35 = arith.constant 0 : index
    %c0_36 = arith.constant 0 : index
    %c0_37 = arith.constant 0 : index
    %47 = vector.load %arg2[%c0_35, %c0_36, %c0_37] : memref<1x4x256xf32, #tpu.memory_space<vmem>>, vector<1x4x256xf32>
    %48 = vector.shape_cast %47 : vector<1x4x256xf32> to vector<4x256xf32>
    %c255_i32 = arith.constant 255 : i32
    %49 = tpu.dynamic_rotate %48 by %c255_i32 dim 1 : vector<4x256xf32>, i32 -> vector<4x256xf32>
    %cst_38 = arith.constant 0.000000e+00 : f32
    %50 = vector.shape_cast %46 : vector<1x256xi1> to vector<1x256xi1>
    %51 = vector.broadcast %50 : vector<1x256xi1> to vector<4x256xi1>
    %52 = vector.broadcast %cst_38 : f32 to vector<4x256xf32>
    %53 = arith.select %51, %52, %49 : vector<4x256xi1>, vector<4x256xf32>
    %c24 = arith.constant 24 : index
    %c0_39 = arith.constant 0 : index
    %54 = vector.load %arg6[%c24, %c0_39] : memref<40x256xf32, #tpu.memory_space<vmem>>, vector<4x256xf32>
    tpu.vector_store %arg6[%c24, %c0_39], %53 {strides = array<i32>} : memref<40x256xf32, #tpu.memory_space<vmem>>, vector<4x256xf32>,
    %c0_40 = arith.constant 0 : index
    %c0_41 = arith.constant 0 : index
    %c0_42 = arith.constant 0 : index
    %55 = vector.load %arg2[%c0_40, %c0_41, %c0_42] : memref<1x4x256xf32, #tpu.memory_space<vmem>>, vector<1x4x256xf32>
    %56 = vector.shape_cast %55 : vector<1x4x256xf32> to vector<4x256xf32>
    %c240_i32 = arith.constant 240 : i32
    %57 = tpu.dynamic_rotate %56 by %c240_i32 dim 1 : vector<4x256xf32>, i32 -> vector<4x256xf32>
    %c32 = arith.constant 32 : index
    %c0_43 = arith.constant 0 : index
    %58 = vector.load %arg6[%c32, %c0_43] : memref<40x256xf32, #tpu.memory_space<vmem>>, vector<4x256xf32>
    tpu.vector_store %arg6[%c32, %c0_43], %57 {strides = array<i32>} : memref<40x256xf32, #tpu.memory_space<vmem>>, vector<4x256xf32>,
    %c32_44 = arith.constant 32 : index
    %c240 = arith.constant 240 : index
    %59 = vector.load %arg6[%c32_44, %c240] : memref<40x256xf32, #tpu.memory_space<vmem>>, vector<4x16xf32>
    tpu.vector_store %arg6[%c32_44, %c240], %3 {strides = array<i32>} : memref<40x256xf32, #tpu.memory_space<vmem>>, vector<4x16xf32>,
    %c0_45 = arith.constant 0 : index
    %c0_46 = arith.constant 0 : index
    %60 = vector.load %arg4[%c0_45, %c0_46] : memref<8x40xf32, #tpu.memory_space<vmem>>, vector<8x40xf32>
    %c0_47 = arith.constant 0 : index
    %c0_48 = arith.constant 0 : index
    %61 = vector.load %arg6[%c0_47, %c0_48] : memref<40x256xf32, #tpu.memory_space<vmem>>, vector<40x256xf32>
    %cst_49 = arith.constant dense<0.000000e+00> : vector<8x256xf32>
    %62 = tpu.matmul %60, %61, %cst_49 {dimension_numbers = #tpu.dot_dimension_numbers<[1], [0], [0], [1], [0, 0, 1, 1], [], []>} : vector<8x40xf32>, vector<40x256xf32>, vector<8x256xf32> -> vector<8x256xf32>
    %c0_50 = arith.constant 0 : index
    %c0_51 = arith.constant 0 : index
    %c0_52 = arith.constant 0 : index
    %63 = vector.load %arg5[%c0_50, %c0_51, %c0_52] : memref<1x8x256xf32, #tpu.memory_space<vmem>>, vector<1x8x256xf32>
    %64 = vector.shape_cast %63 : vector<1x8x256xf32> to vector<8x256xf32>
    %65 = vector.shape_cast %62 : vector<8x256xf32> to vector<1x8x256xf32>
    tpu.vector_store %arg5[%c0_50, %c0_51, %c0_52], %65 {strides = array<i32>} : memref<1x8x256xf32, #tpu.memory_space<vmem>>, vector<1x8x256xf32>,
    return
  }
  func.func @transform_0(%arg0: i32, %arg1: i32) -> (i32, i32, i32) {
    %c0_i32 = arith.constant 0 : i32
    %c0_i32_0 = arith.constant 0 : i32
    return %arg1, %c0_i32, %arg0 : i32, i32, i32
  }
  func.func @transform_1(%arg0: i32, %arg1: i32) -> (i32, i32, i32, i32, i32) {
    %c0_i32 = arith.constant 0 : i32
    %c0_i32_0 = arith.constant 0 : i32
    %c0_i32_1 = arith.constant 0 : i32
    %c0_i32_2 = arith.constant 0 : i32
    return %arg1, %arg0, %c0_i32, %c0_i32_0, %c0_i32_1 : i32, i32, i32, i32, i32
  }
  func.func @transform_2(%arg0: i32, %arg1: i32) -> (i32, i32) {
    %c0_i32 = arith.constant 0 : i32
    %c0_i32_0 = arith.constant 0 : i32
    %c0_i32_1 = arith.constant 0 : i32
    return %c0_i32, %c0_i32_0 : i32, i32
  }
  func.func @transform_3(%arg0: i32, %arg1: i32) -> (i32, i32, i32) {
    %c0_i32 = arith.constant 0 : i32
    %c0_i32_0 = arith.constant 0 : i32
    return %arg1, %c0_i32, %arg0 : i32, i32, i32
  }
}

</mosaic_0001>

<llo_original>
// kernel: tpu_custom_call.1
$region0: #{tpu_custom_call.1}
  #allocation0 [shape = 'u32[]', space=smem, size = 0x4, offset = 0x4, fixed_abs, tag = 'smem constant byte address 0x4 - core index']
  #allocation1 [shape = 'u32[144,128]{1,0:T(1,128)}', space=vmem, size = 0x12000, scoped, tag = 'internal scratch']
  #allocation2 [shape = 'f32[40,256]{1,0:T(8,128)}', space=vmem, size = 0xa000, scoped, tag = 'scratch operand']
  %s0 = inlined_call_operand.hbm [shape: f32[2,4,256], index: 0, kind: input, shape index: {}]
  %s1 = inlined_call_operand.hbm [shape: f32[2,1,2,4,16], index: 1, kind: input, shape index: {}]
  %s2 = inlined_call_operand.hbm [shape: f32[8,40], index: 2, kind: input, shape index: {}]
  %s3 = inlined_call_operand.hbm [shape: f32[2,8,256], index: 3, kind: output, shape index: {}]
  %s4 = sld [smem:[#allocation0]]
  $region57: #{tpu_custom_call.1} parent=0
    _
  %s6 = ssub.s32 1, %s4
  %s7 = scalar_select 0, %s6, %s4
  $region1: #{tpu_custom_call.1} parent=0
    #allocation3 [shape = 'u8[8192]{0}', space=vmem, size = 0x2000, scoped, tag = 'input window, operand 0']
    #allocation4 [shape = 's32[2]{0}', space=sflag, size = 0x8, scoped, tag = 'scoped memory for tpu_custom_call.1']
    #allocation5 [shape = 's32[2]{0}', space=sflag, size = 0x8, scoped, tag = 'scoped memory for tpu_custom_call.1']
    #allocation6 [shape = 'u8[8192]{0}', space=vmem, size = 0x2000, scoped, tag = 'input window, operand 1']
    #allocation7 [shape = 's32[2]{0}', space=sflag, size = 0x8, scoped, tag = 'scoped memory for tpu_custom_call.1']
    #allocation8 [shape = 'u8[4096]{0}', space=vmem, size = 0x1000, scoped, tag = 'input window, operand 2, single buffered']
    #allocation9 [shape = 'u8[16384]{0}', space=vmem, size = 0x4000, scoped, tag = 'output window, operand 0']
    %8 = vsyncpa [#allocation4], 0
    %s9 = scalar_lea.sflag [#allocation4], 1
    %10 = vsyncpa %s9, 0
    %11 = vsyncpa [#allocation7], 0
    %s12 = scalar_lea.sflag [#allocation7], 1
    %13 = vsyncpa %s12, 0
    %14 = vsyncpa [#allocation5], 0
    %s15 = scalar_lea.sflag [#allocation5], 1
    %16 = vsyncpa %s15, 0
    loop: start=0, step=1, limit=4
    $region2: #{tpu_custom_call.1} parent=1 // loop_pre_header
      _
    $region3: #{tpu_custom_call.1} parent=1 // loop_header
      %s18 = sphi 0, %s22
      %p19 = scmp.ge.s32.totalorder %s18, 4
      %s25 = sphi 0, %s37
      %s26 = sphi 0, %s33
      %s27 = sphi 0, %s25
      %s28 = sphi 0, %s26
      %s29 = sphi 0, %s27
      %s30 = sphi 0, %s28
      %s42 = sphi 0, %s44
      %s45 = sphi 0, %s42
      %s46 = sphi 0, %s45
      %s62 = sphi 0, %s46
      %s70 = sphi 0, %s72
      %s73 = sphi 0, %s70
      %s74 = sphi 0, %s73
      %s90 = sphi 0, %s74
      %s94 = sphi 0, %s94
      %s96 = sphi 0, %s94
      %s97 = sphi 0, %s96
      %s111 = sphi 0, %s97
      %s119 = sphi 0, %s121
      %s122 = sphi 0, %s119
      %s123 = sphi 0, %s122
      %s139 = sphi 0, %s123
    $region4: #{tpu_custom_call.1} parent=1 // loop_header_branch
      %21 = sbr.rel (%p19) target = $region8
    $region5: #{tpu_custom_call.1} parent=1 // loop_body
      %s23 = ssub.s32 %s18, 1
      %s24 = ssub.s32 %s18, 2
      %s31 = sadd.s32 1, %s26
      %p32 = scmp.ge.s32.totalorder %s31, 2
      %s33 = scalar_select %p32, 0, %s31
      %s34 = sadd.s32 1, %s25
      %s35 = scalar_select %p32, %s34, %s25
      %p36 = scmp.ge.s32.totalorder %s35, 1
      %s37 = scalar_select %p36, 0, %s35
      %s38 = ssub.s32 %s26, %s33
      %s39 = ssub.s32 %s25, %s37
      %s40 = sor.u32 %s38, %s39
      %p41 = scmp.eq.s32.totalorder %s40, 0
      %s43 = sadd.s32 %s42, 1
      %s44 = scalar_select %p41, %s42, %s43
      %p47 = pneg %p41
      %p48 = scmp.eq.s32.totalorder %s18, 1
      %p49 = por %p47, %p48
      %p50 = scmp.ne.s32.totalorder %s42, %s45
      %p51 = scmp.eq.s32.totalorder %s18, 0
      %p52 = por %p50, %p51
      %p53 = scmp.ne.s32.totalorder %s42, %s45
      %p54 = scmp.eq.s32.totalorder %s23, 1
      %p55 = por %p53, %p54
      %p56 = scmp.ne.s32.totalorder %s45, %s46
      %p57 = scmp.eq.s32.totalorder %s23, 0
      %p58 = por %p56, %p57
      %p59 = scmp.ne.s32.totalorder %s45, %s46
      %p60 = scmp.eq.s32.totalorder %s24, 1
      %p61 = por %p59, %p60
      %p63 = scmp.ne.s32.totalorder %s46, %s62
      %p64 = scmp.eq.s32.totalorder %s24, 0
      %p65 = por %p63, %p64
      %s66 = ssub.s32 %s26, %s33
      %s67 = ssub.s32 %s25, %s37
      %s68 = sor.u32 %s66, %s67
      %p69 = scmp.eq.s32.totalorder %s68, 0
      %s71 = sadd.s32 %s70, 1
      %s72 = scalar_select %p69, %s70, %s71
      %p75 = pneg %p69
      %p76 = scmp.eq.s32.totalorder %s18, 1
      %p77 = por %p75, %p76
      %p78 = scmp.ne.s32.totalorder %s70, %s73
      %p79 = scmp.eq.s32.totalorder %s18, 0
      %p80 = por %p78, %p79
      %p81 = scmp.ne.s32.totalorder %s70, %s73
      %p82 = scmp.eq.s32.totalorder %s23, 1
      %p83 = por %p81, %p82
      %p84 = scmp.ne.s32.totalorder %s73, %s74
      %p85 = scmp.eq.s32.totalorder %s23, 0
      %p86 = por %p84, %p85
      %p87 = scmp.ne.s32.totalorder %s73, %s74
      %p88 = scmp.eq.s32.totalorder %s24, 1
      %p89 = por %p87, %p88
      %p91 = scmp.ne.s32.totalorder %s74, %s90
      %p92 = scmp.eq.s32.totalorder %s24, 0
      %p93 = por %p91, %p92
      %s95 = sadd.s32 %s94, 1
      %p98 = scmp.eq.s32.totalorder %s18, 1
      %p99 = scmp.ne.s32.totalorder %s94, %s96
      %p100 = scmp.eq.s32.totalorder %s18, 0
      %p101 = por %p99, %p100
      %p102 = scmp.ne.s32.totalorder %s94, %s96
      %p103 = scmp.eq.s32.totalorder %s23, 1
      %p104 = por %p102, %p103
      %p105 = scmp.ne.s32.totalorder %s96, %s97
      %p106 = scmp.eq.s32.totalorder %s23, 0
      %p107 = por %p105, %p106
      %p108 = scmp.ne.s32.totalorder %s96, %s97
      %p109 = scmp.eq.s32.totalorder %s24, 1
      %p110 = por %p108, %p109
      %p112 = scmp.ne.s32.totalorder %s97, %s111
      %p113 = scmp.eq.s32.totalorder %s24, 0
      %p114 = por %p112, %p113
      %s115 = ssub.s32 %s26, %s33
      %s116 = ssub.s32 %s25, %s37
      %s117 = sor.u32 %s115, %s116
      %p118 = scmp.eq.s32.totalorder %s117, 0
      %s120 = sadd.s32 %s119, 1
      %s121 = scalar_select %p118, %s119, %s120
      %p124 = pneg %p118
      %p125 = scmp.eq.s32.totalorder %s18, 1
      %p126 = por %p124, %p125
      %p127 = scmp.ne.s32.totalorder %s119, %s122
      %p128 = scmp.eq.s32.totalorder %s18, 0
      %p129 = por %p127, %p128
      %p130 = scmp.ne.s32.totalorder %s119, %s122
      %p131 = scmp.eq.s32.totalorder %s23, 1
      %p132 = por %p130, %p131
      %p133 = scmp.ne.s32.totalorder %s122, %s123
      %p134 = scmp.eq.s32.totalorder %s23, 0
      %p135 = por %p133, %p134
      %p136 = scmp.ne.s32.totalorder %s122, %s123
      %p137 = scmp.eq.s32.totalorder %s24, 1
      %p138 = por %p136, %p137
      %p140 = scmp.ne.s32.totalorder %s123, %s139
      %p141 = scmp.eq.s32.totalorder %s24, 0
      %p142 = por %p140, %p141
      %p143 = scmp.le.s32.totalorder 1, %s18
      %p144 = scmp.lt.s32.totalorder %s18, 3
      %p145 = pnand %p143, %p144
      %p146 = pneg %p145
      // Predicated region
      $region9: #{tpu_custom_call.1} parent=5 // pred_check
        _
      $region10: #{tpu_custom_call.1} parent=5 // pred_check_branch
        %148 = sbr.rel (%p145) target = $region12
      $region11: #{tpu_custom_call.1} parent=5 // pred_region
        %s149 = ssub.s32 %s18, 1
        // Predicated region
        $region13: #{tpu_custom_call.1} parent=11 // pred_check
          %p150 = pneg %p107
        $region14: #{tpu_custom_call.1} parent=11 // pred_check_branch
          %152 = sbr.rel (%p150) target = $region16
        $region15: #{tpu_custom_call.1} parent=11 // pred_region
          %s154 = ssub.s32 128, 128
          %155 = vsyncadd [#allocation7], %s154
          %s157 = sshll.u32 [#allocation8], 4
          %s158 = int_to_ptr.vmem [resolvable:$true] %s157
          %160 = dma.hbm_to_vmem [thread:$0]  %s2, 128, %s158, [#allocation7]
        $region16: #{tpu_custom_call.1} parent=11 // pred_fallthru
          _
      $region12: #{tpu_custom_call.1} parent=5 // pred_fallthru
        _
      %p161 = scmp.lt.s32.totalorder %s18, 2
      // Predicated region
      $region17: #{tpu_custom_call.1} parent=5 // pred_check
        %p162 = pneg %p161
      $region18: #{tpu_custom_call.1} parent=5 // pred_check_branch
        %164 = sbr.rel (%p162) target = $region20
      $region19: #{tpu_custom_call.1} parent=5 // pred_region
        // Predicated region
        $region21: #{tpu_custom_call.1} parent=19 // pred_check
          %p165 = pneg %p52
        $region22: #{tpu_custom_call.1} parent=19 // pred_check_branch
          %167 = sbr.rel (%p165) target = $region24
        $region23: #{tpu_custom_call.1} parent=19 // pred_region
          %s168 = sand.u32 %s42, 1
          %s169 = scalar_lea.sflag [#allocation4], %s168
          %s170 = sand.u32 %s42, 1
          %s171 = smul.addr %s170, 8
          %s172 = scalar_lea.vmem [#allocation3], %s171
          %s173 = smul.u32 2, %s25
          %s175 = ssub.s32 128, 128
          %176 = vsyncadd %s169, %s175
          %s177 = smul.addr %s26, 2
          %s178 = sadd.s32 %s173, %s177
          %s179 = smul.addr %s178, 64
          %s180 = scalar_lea.hbm %s0, %s179
          %s182 = sshll.u32 %s172, 4
          %s183 = int_to_ptr.vmem [resolvable:$true] %s182
          %185 = dma.hbm_to_vmem [thread:$0]  %s180, 128, %s183, %s169
        $region24: #{tpu_custom_call.1} parent=19 // pred_fallthru
          _
        // Predicated region
        $region25: #{tpu_custom_call.1} parent=19 // pred_check
          %p186 = pneg %p80
        $region26: #{tpu_custom_call.1} parent=19 // pred_check_branch
          %188 = sbr.rel (%p186) target = $region28
        $region27: #{tpu_custom_call.1} parent=19 // pred_region
          %s189 = sand.u32 %s18, 1
          %s190 = scalar_lea.sflag [#allocation7], %s189
          %s191 = sand.u32 %s70, 1
          %s192 = smul.addr %s191, 8
          %s193 = scalar_lea.vmem [#allocation6], %s192
          %s195 = ssub.s32 128, 128
          %196 = vsyncadd %s190, %s195
          %s197 = smul.addr %s25, 2
          %s198 = smul.addr %s26, 2
          %s199 = sadd.s32 %s197, %s198
          %s200 = smul.addr %s199, 64
          %s201 = scalar_lea.hbm %s1, %s200
          %s202 = sshll.u32 %s193, 4
          %s203 = int_to_ptr.vmem [resolvable:$true] %s202
          %208 = dma.hbm_to_vmem [thread:$0]  %s201, 128, %s203, %s190, 64, 64, 4
        $region28: #{tpu_custom_call.1} parent=19 // pred_fallthru
          _
      $region20: #{tpu_custom_call.1} parent=5 // pred_fallthru
        _
      %p209 = scmp.le.s32.totalorder 1, %s18
      %p210 = scmp.lt.s32.totalorder %s18, 3
      %p211 = pnand %p209, %p210
      %p212 = pneg %p211
      // Predicated region
      $region29: #{tpu_custom_call.1} parent=5 // pred_check
        _
      $region30: #{tpu_custom_call.1} parent=5 // pred_check_branch
        %214 = sbr.rel (%p211) target = $region32
      $region31: #{tpu_custom_call.1} parent=5 // pred_region
        %s215 = ssub.s32 %s18, 1
        %s216 = sand.u32 %s45, 1
        %s217 = scalar_lea.sflag [#allocation4], %s216
        %s218 = sand.u32 %s45, 1
        %s219 = smul.addr %s218, 8
        %s220 = scalar_lea.vmem [#allocation3], %s219
        // Predicated region
        $region33: #{tpu_custom_call.1} parent=31 // pred_check
          %p221 = pneg %p58
        $region34: #{tpu_custom_call.1} parent=31 // pred_check_branch
          %223 = sbr.rel (%p221) target = $region36
        $region35: #{tpu_custom_call.1} parent=31 // pred_region
          %224 = dma.done %s217, 128
        $region36: #{tpu_custom_call.1} parent=31 // pred_fallthru
          _
        %s225 = sand.u32 %s23, 1
        %s226 = scalar_lea.sflag [#allocation7], %s225
        %s227 = sand.u32 %s73, 1
        %s228 = smul.addr %s227, 8
        %s229 = scalar_lea.vmem [#allocation6], %s228
        // Predicated region
        $region37: #{tpu_custom_call.1} parent=31 // pred_check
          %p230 = pneg %p86
        $region38: #{tpu_custom_call.1} parent=31 // pred_check_branch
          %232 = sbr.rel (%p230) target = $region40
        $region39: #{tpu_custom_call.1} parent=31 // pred_region
          %233 = dma.done %s226, 128
        $region40: #{tpu_custom_call.1} parent=31 // pred_fallthru
          _
        // Predicated region
        $region41: #{tpu_custom_call.1} parent=31 // pred_check
          %p234 = pneg %p107
        $region42: #{tpu_custom_call.1} parent=31 // pred_check_branch
          %236 = sbr.rel (%p234) target = $region44
        $region43: #{tpu_custom_call.1} parent=31 // pred_region
          %237 = dma.done [#allocation7], 128
        $region44: #{tpu_custom_call.1} parent=31 // pred_fallthru
          _
        %s238 = sand.u32 %s45, 1
        %s239 = scalar_lea.sflag [#allocation4], %s238
        %s240 = sand.u32 %s45, 1
        %s241 = smul.addr %s240, 8
        %s242 = scalar_lea.vmem [#allocation3], %s241
        %p243 = pneg %p58
        %p244 = pneg %p55
        %s245 = sand.u32 %s23, 1
        %s246 = scalar_lea.sflag [#allocation7], %s245
        %s247 = sand.u32 %s73, 1
        %s248 = smul.addr %s247, 8
        %s249 = scalar_lea.vmem [#allocation6], %s248
        %p250 = pneg %p86
        %p251 = pneg %p83
        %p252 = pneg %p107
        %p253 = pneg %p104
        %p254 = pneg %p135
        %p255 = pneg %p132
        %s256 = sand.u32 %s122, 1
        %s257 = scalar_lea.sflag [#allocation5], %s256
        %s258 = sand.u32 %s122, 1
        %s259 = smul.addr %s258, 16
        %s260 = scalar_lea.vmem [#allocation9], %s259
        %s261 = smul.u32 2, %s27
        %s262 = smul.u32 2, %s27
        %v263 = vld [vmem:[%s229] sm:$0xf]
        %s264 = scalar_lea.vmem %s229, 4 [#allocation6]
        %v265 = vld [vmem:[%s264] sm:$0xf]
        %v266 = vlaneseq
        %v267 = vand.u32 %v266, 127
        %v268 = vadd.s32 %v267, 128
        %vm269 = vcmp.lt.s32.totalorder %v267, 0
        %v270 = vsub.s32 0, %v267
        %v271 = vsel %vm269, %v270, %v267
        %v272 = vshrl.u32 %v271, 4
        %v273 = vand.u32 %v271, 15
        %v274 = vsub.s32 0, %v273
        %v275 = vsel %vm269, %v274, %v273
        %vm276 = vcmp.lt.s32.totalorder %v268, 0
        %v277 = vsub.s32 0, %v268
        %v278 = vsel %vm276, %v277, %v268
        %v279 = vshrl.u32 %v278, 4
        %v280 = vand.u32 %v278, 15
        %v281 = vsub.s32 0, %v280
        %v282 = vsel %vm276, %v281, %v280
        %vm283 = vcmp.ne.s32.totalorder %v275, 0
        %vm284 = vcmp.ne.s32.totalorder %v282, 0
        %vm285 = vcmp.lt.s32.totalorder %v275, 0
        %vm286 = vcmp.lt.s32.totalorder %v282, 0
        %vm287 = vmand %vm285, %vm283
        %vm288 = vmand %vm286, %vm284
        %v289 = vadd.s32 %v275, 16
        %v290 = vadd.s32 %v282, 16
        %v291 = vsel %vm287, %v289, %v275
        %v292 = vsel %vm288, %v290, %v282
        %293 = vst [vmem:[#allocation2] sm:$0xf0] 0.0
        %294 = vst [vmem:[#allocation2 + $0x8] sm:$0xf0] 0.0
        %295 = vst [vmem:[#allocation2 + $0x10] sm:$0xf0] 0.0
        %296 = vst [vmem:[#allocation2 + $0x18] sm:$0xf0] 0.0
        %297 = vst [vmem:[#allocation2 + $0x20] sm:$0xf0] 0.0
        %298 = vst [vmem:[#allocation2 + $0x28] sm:$0xf0] 0.0
        %299 = vst [vmem:[#allocation2 + $0x30] sm:$0xf0] 0.0
        %300 = vst [vmem:[#allocation2 + $0x38] sm:$0xf0] 0.0
        %301 = vst [vmem:[#allocation2 + $0x40] sm:$0xf0] 0.0
        %302 = vst [vmem:[#allocation2 + $0x48] sm:$0xf0] 0.0
        %v303 = vld [vmem:[%s220] sm:$0xff]
        %v305 = vcombine.high %v303, %v303
        %307 = vrot.lane.b32.xlu0 %v303, 16
        %v308 = vpop.permute.xlu0 %307
        %309 = vrot.lane.b32.xlu0 %v305, 16
        %v310 = vpop.permute.xlu0 %309
        %vm311 = vcmp.lt.s32.totalorder %v267, 16
        %v312 = vsel %vm311, %v308, %v310
        %v313 = vsel %vm311, %v310, %v308
        %314 = vst [vmem:[#allocation2] sm:$0xf] %v313
        %315 = vst [vmem:[#allocation2 + $0x8] sm:$0xf] %v312
        %vm316 = vcmask 125952
        %317 = vst.msk [vmem:[#allocation2] sm:$0xf] %vm316, %v263
        %vm318 = vcmp.eq.s32.totalorder %v291, 0
        %vm319 = vcmp.eq.s32.totalorder %v292, 0
        %v320 = vld [vmem:[%s220] sm:$0xff]
        %v322 = vcombine.high %v320, %v320
        %324 = vrot.lane.b32.xlu0 %v320, 1
        %v325 = vpop.permute.xlu0 %324
        %326 = vrot.lane.b32.xlu0 %v322, 1
        %v327 = vpop.permute.xlu0 %326
        %vm328 = vcmp.lt.s32.totalorder %v267, 1
        %v329 = vsel %vm328, %v325, %v327
        %v330 = vsel %vm328, %v327, %v325
        %v331 = vsel %vm318, 1, 0
        %v332 = vsel %vm319, 1, 0
        %vm333 = vcmp.eq.s32.totalorder %v331, 1
        %vm334 = vcmp.eq.s32.totalorder %v332, 1
        %v335 = vsel %vm333, 0.0, %v330
        %v336 = vsel %vm334, 0.0, %v329
        %337 = vst [vmem:[#allocation2 + $0x10] sm:$0xf] %v335
        %338 = vst [vmem:[#allocation2 + $0x18] sm:$0xf] %v336
        %v339 = vld [vmem:[%s220] sm:$0xff]
        %v341 = vcombine.high %v339, %v339
        %343 = vst [vmem:[#allocation2 + $0x20] sm:$0xf] %v339
        %344 = vst [vmem:[#allocation2 + $0x28] sm:$0xf] %v341
        %vm345 = vcmp.eq.s32.totalorder %v291, 15
        %vm346 = vcmp.eq.s32.totalorder %v292, 15
        %v347 = vld [vmem:[%s220] sm:$0xff]
        %v349 = vcombine.high %v347, %v347
        %351 = vrot.lane.b32.xlu0 %v347, 127
        %v352 = vpop.permute.xlu0 %351
        %353 = vrot.lane.b32.xlu0 %v349, 127
        %v354 = vpop.permute.xlu0 %353
        %vm355 = vcmp.lt.s32.totalorder %v267, 127
        %v356 = vsel %vm355, %v352, %v354
        %v357 = vsel %vm355, %v354, %v352
        %v358 = vsel %vm345, 1, 0
        %v359 = vsel %vm346, 1, 0
        %vm360 = vcmp.eq.s32.totalorder %v358, 1
        %vm361 = vcmp.eq.s32.totalorder %v359, 1
        %v362 = vsel %vm360, 0.0, %v356
        %v363 = vsel %vm361, 0.0, %v357
        %364 = vst [vmem:[#allocation2 + $0x30] sm:$0xf] %v362
        %365 = vst [vmem:[#allocation2 + $0x38] sm:$0xf] %v363
        %v366 = vld [vmem:[%s220] sm:$0xff]
        %v368 = vcombine.high %v366, %v366
        %370 = vrot.lane.b32.xlu0 %v366, 112
        %v371 = vpop.permute.xlu0 %370
        %372 = vrot.lane.b32.xlu0 %v368, 112
        %v373 = vpop.permute.xlu0 %372
        %vm374 = vcmp.lt.s32.totalorder %v267, 112
        %v375 = vsel %vm374, %v371, %v373
        %v376 = vsel %vm374, %v373, %v371
        %377 = vst [vmem:[#allocation2 + $0x40] sm:$0xf] %v375
        %378 = vst [vmem:[#allocation2 + $0x48] sm:$0xf] %v376
        %380 = vrot.lane.b32.xlu0 %v265, 112
        %v381 = vpop.permute.xlu0 %380
        %vm383 = vcmask 1044352
        %384 = vst.msk [vmem:[#allocation2 + $0x48] sm:$0xf] %vm383, %v381
        %v385 = vld [vmem:[#allocation8] sm:$0xff]
        %v386 = vld [vmem:[#allocation2] sm:$0xff]
        %v387 = vld [vmem:[#allocation2 + $0x8] sm:$0xff]
        %v388 = vld [vmem:[#allocation2 + $0x10] sm:$0xff]
        %v389 = vld [vmem:[#allocation2 + $0x18] sm:$0xff]
        %v390 = vld [vmem:[#allocation2 + $0x20] sm:$0xff]
        %v391 = vld [vmem:[#allocation2 + $0x28] sm:$0xff]
        %v392 = vld [vmem:[#allocation2 + $0x30] sm:$0xff]
        %v393 = vld [vmem:[#allocation2 + $0x38] sm:$0xff]
        %v394 = vld [vmem:[#allocation2 + $0x40] sm:$0xff]
        %v395 = vld [vmem:[#allocation2 + $0x48] sm:$0xff]
        %vm396 = vcmask 326656
        %v398 = vsel %vm396, %v385, 0
        %400 = vmatprep.subr.mxu0 %v387
        %401 = vmatpush1.msra.mxu0 %v386
        %402 = vmatprep.subr.mxu0 %v389
        %403 = vmatpush1.msra.mxu0 %v388
        %404 = vmatprep.subr.mxu0 %v391
        %405 = vmatpush1.msra.mxu0 %v390
        %406 = vmatprep.subr.mxu0 %v393
        %407 = vmatpush1.msra.mxu0 %v392
        %408 = vmatprep.subr.mxu0 %v395
        %409 = vmatpush1.msra.mxu0 %v394
        %410 = vmatprep.subr.mxu0 0.0
        %411 = vmatpush1.msra.mxu0 0.0
        %412 = vmatprep.subr.mxu0 0.0
        %413 = vmatpush1.msra.mxu0 0.0
        %414 = vmatprep.subr.mxu0 0.0
        %415 = vmatpush1.msra.mxu0 0.0
        %416 = vmatprep.subr.mxu0 0.0
        %417 = vmatpush1.msra.mxu0 0.0
        %418 = vmatprep.subr.mxu0 0.0
        %419 = vmatpush1.msra.mxu0 0.0
        %420 = vmatprep.subr.mxu0 0.0
        %421 = vmatpush1.msra.mxu0 0.0
        %422 = vmatprep.subr.mxu0 0.0
        %423 = vmatpush1.msra.mxu0 0.0
        %424 = vmatprep.subr.mxu0 0.0
        %425 = vmatpush1.msra.mxu0 0.0
        %426 = vmatprep.subr.mxu0 0.0
        %427 = vmatpush1.msra.mxu0 0.0
        %428 = vmatprep.subr.mxu0 0.0
        %429 = vmatpush1.msra.mxu0 0.0
        %430 = vmatprep.subr.mxu0 0.0
        %431 = vmatpush1.msra.mxu0 0.0
        %432 = vmatprep.subr.mxu0 0.0
        %433 = vmatpush1.msra.mxu0 0.0
        %434 = vmatprep.subr.mxu0 0.0
        %435 = vmatpush1.msra.mxu0 0.0
        %436 = vmatprep.subr.mxu0 0.0
        %437 = vmatpush1.msra.mxu0 0.0
        %438 = vmatprep.subr.mxu0 0.0
        %439 = vmatpush1.msra.mxu0 0.0
        %440 = vmatprep.subr.mxu0 0.0
        %441 = vmatpush1.msra.mxu0 0.0
        %442 = vmatprep.subr.mxu0 0.0
        %443 = vmatpush1.msra.mxu0 0.0
        %444 = vmatprep.subr.mxu0 0.0
        %445 = vmatpush1.msra.mxu0 0.0
        %446 = vmatprep.subr.mxu0 0.0
        %447 = vmatpush1.msra.mxu0 0.0
        %448 = vmatprep.subr.mxu0 0.0
        %449 = vmatpush1.msra.mxu0 0.0
        %450 = vmatprep.subr.mxu0 0.0
        %451 = vmatpush1.msra.mxu0 0.0
        %452 = vmatprep.subr.mxu0 0.0
        %453 = vmatpush1.msra.mxu0 0.0
        %454 = vmatprep.subr.mxu0 0.0
        %455 = vmatpush1.msra.mxu0 0.0
        %456 = vmatprep.subr.mxu0 0.0
        %457 = vmatpush1.msra.mxu0 0.0
        %458 = vmatprep.subr.mxu0 0.0
        %459 = vmatpush1.msra.mxu0 0.0
        %460 = vmatprep.subr.mxu0 0.0
        %461 = vmatpush1.msra.mxu0 0.0
        %462 = vmatprep.subr.mxu0 0.0
        %463 = vmatpush1.msra.mxu0 0.0
        %464 = vmatprep.mubr.f32.mxu0 0.0
        %465 = vmatmul.mubr.f32.gmra.mrb[0].mxu0 %v398
        %v466 = vpop.f32.mrb[0].mxu0
        %v467 = vadd.f32 0.0, %v466
        %v468 = vpop.f32.mrb[0].mxu0
        %v469 = vadd.f32 0.0, %v468
        %470 = vdwg.mxu0
        %471 = vst [vmem:[%s260] sm:$0xff] %v467
        %472 = vst [vmem:[%s260 + $0x8] sm:$0xff] %v469
        %s473 = sand.u32 %s122, 1
        %s474 = scalar_lea.sflag [#allocation5], %s473
        %s475 = sand.u32 %s122, 1
        %s476 = smul.addr %s475, 16
        %s477 = scalar_lea.vmem [#allocation9], %s476
        // Predicated region
        $region45: #{tpu_custom_call.1} parent=31 // pred_check
          %p478 = pneg %p132
        $region46: #{tpu_custom_call.1} parent=31 // pred_check_branch
          %480 = sbr.rel (%p478) target = $region48
        $region47: #{tpu_custom_call.1} parent=31 // pred_region
          %s481 = smul.u32 2, %s27
          %s483 = ssub.s32 256, 256
          %484 = vsyncadd %s474, %s483
          %s485 = smul.addr %s28, 2
          %s486 = sadd.s32 %s481, %s485
          %s487 = smul.addr %s486, 128
          %s488 = scalar_lea.hbm %s3, %s487
          %s490 = sshll.u32 %s477, 4
          %s491 = int_to_ptr.vmem [resolvable:$true] %s490
          %493 = dma.vmem_to_hbm [thread:$0]  %s491, 256, %s488, %s474
        $region48: #{tpu_custom_call.1} parent=31 // pred_fallthru
          _
      $region32: #{tpu_custom_call.1} parent=5 // pred_fallthru
        _
      %p494 = scmp.le.s32.totalorder 2, %s18
      // Predicated region
      $region49: #{tpu_custom_call.1} parent=5 // pred_check
        %p495 = pneg %p494
      $region50: #{tpu_custom_call.1} parent=5 // pred_check_branch
        %497 = sbr.rel (%p495) target = $region52
      $region51: #{tpu_custom_call.1} parent=5 // pred_region
        %s498 = ssub.s32 %s18, 2
        // Predicated region
        $region53: #{tpu_custom_call.1} parent=51 // pred_check
          %p499 = pneg %p138
        $region54: #{tpu_custom_call.1} parent=51 // pred_check_branch
          %501 = sbr.rel (%p499) target = $region56
        $region55: #{tpu_custom_call.1} parent=51 // pred_region
          %s502 = sand.u32 %s123, 1
          %s503 = scalar_lea.sflag [#allocation5], %s502
          %s504 = sand.u32 %s123, 1
          %s505 = smul.addr %s504, 16
          %s506 = scalar_lea.vmem [#allocation9], %s505
          %507 = dma.done %s503, 256
        $region56: #{tpu_custom_call.1} parent=51 // pred_fallthru
          _
      $region52: #{tpu_custom_call.1} parent=5 // pred_fallthru
        _
    $region6: #{tpu_custom_call.1} parent=1 // loop_footer
      %s22 = sadd.s32 1, %s18
    $region7: #{tpu_custom_call.1} parent=1 // loop_footer_branch
      %17 = sbr.rel target = $region3
    $region8: #{tpu_custom_call.1} parent=1 // loop_exit
      _
    %508 = vsyncpa [#allocation4], 1
    %s509 = scalar_lea.sflag [#allocation4], 1
    %510 = vsyncpa %s509, 1
    %511 = vsyncpa [#allocation7], 1
    %s512 = scalar_lea.sflag [#allocation7], 1
    %513 = vsyncpa %s512, 1
    %514 = vsyncpa [#allocation5], 1
    %s515 = scalar_lea.sflag [#allocation5], 1
    %516 = vsyncpa %s515, 1

</llo_original>
